<compile_context>
chip_gen: v5e
topology: v5e:2x2
jax: 0.10.0
libtpu: 0.0.40
codegen_flags: <defaults>
</compile_context>

<pallas_src>
import functools

import jax
import jax.numpy as jnp
from jax.experimental import pallas as pl
from jax.experimental.pallas import tpu as pltpu

LANES = 128
SUBLANES = 8


def _combo_partials_kernel(o_ref, m_ref, part_ref, *, beta, eps, rows_valid,
                           tile_rows, steps_per_chunk, num_tiles, has_tail,
                           has_overhang, binary_masks, reduce_ilp):
    p = pl.program_id(0)   # parallel chunk (v7x: one per TensorCore)
    j = pl.program_id(1)   # tile within chunk (reduction axis)

    @pl.when(j == 0)
    def _init():
        part_ref[...] = jnp.zeros_like(part_ref)

    o = o_ref[...].astype(jnp.float32)
    m = m_ref[...].astype(jnp.float32)

    def tile_reduce(x):
        # (tile_rows, 128) -> (8, 128); split into a few independent partial
        # chains so the adds can spread over the 4 VALU slots.
        r = tile_rows // SUBLANES
        x = x.reshape(r, SUBLANES, LANES)
        ilp = 1
        c = int(reduce_ilp)
        while c > 1:
            if r % c == 0:
                ilp = c
                break
            c //= 2
        if ilp > 1:
            x = jnp.sum(x.reshape(ilp, r // ilp, SUBLANES, LANES), axis=1)
        return jnp.sum(x, axis=0)

    def accumulate(mask_tail):
        inter_e = o * m
        union_e = o + m
        oc = jnp.clip(o, eps, 1.0 - eps)
        if binary_masks:
            # Single transcendental per element when masks are hard {0,1}.
            fg = m > 0.5
            pre_e = jnp.where(fg, beta, 1.0 - beta) * jnp.log(
                jnp.where(fg, oc, 1.0 - oc))
        else:
            pre_e = beta * (m * jnp.log(oc)) + (1.0 - beta) * (
                (1.0 - m) * jnp.log(1.0 - oc))
        if mask_tail:
            # Rows hanging past the real data in the partial last block hold
            # uninitialized VMEM; kill them with a NaN-safe value select
            # applied to the *results*, so no analytic correction is needed.
            base = (num_tiles - 1) * tile_rows
            row = jax.lax.broadcasted_iota(jnp.int32, (tile_rows, LANES), 0)
            valid = (base + row) < rows_valid
            inter_e = jnp.where(valid, inter_e, 0.0)
            union_e = jnp.where(valid, union_e, 0.0)
            pre_e = jnp.where(valid, pre_e, 0.0)
        part_ref[0, 0] += tile_reduce(inter_e)   # intersection
        part_ref[0, 1] += tile_reduce(union_e)   # sum(outputs) + sum(masks)
        part_ref[0, 2] += tile_reduce(pre_e)     # sum(pre_mce)

    if not has_tail and not has_overhang:
        # Every grid step is a full, in-range tile: single unmasked path.
        accumulate(False)
    else:
        tile_idx = p * steps_per_chunk + j
        interior_limit = (num_tiles - 1) if has_tail else num_tiles

        @pl.when(tile_idx < interior_limit)      # unmasked fast path
        def _interior():
            accumulate(False)

        if has_tail:
            @pl.when(tile_idx == num_tiles - 1)  # masked path, last tile only
            def _tail():
                accumulate(True)
        # Overhang tiles (tile_idx >= num_tiles, only when the chunk split
        # doesn't divide evenly) fall through both branches and are skipped.


def combo_loss(outputs, masks, alpha, beta, *, tile_rows=8192,
               binary_masks=None, num_parallel_chunks=2, reduce_ilp=4,
               input_buffers=2):
    assert outputs.shape == masks.shape
    eps = 1e-4
    alpha = float(alpha)
    beta = float(beta)

    if binary_masks is None:
        binary_masks = bool(jnp.issubdtype(masks.dtype, jnp.integer)
                            or jnp.issubdtype(masks.dtype, jnp.bool_))

    n_valid = int(outputs.size)
    flat_o = outputs.reshape(-1)
    flat_m = masks.reshape(-1)

    rows = n_valid // LANES
    rem = n_valid - rows * LANES   # < 128 ragged elements, handled in jnp

    intersection = jnp.float32(0.0)
    union = jnp.float32(0.0)
    pre_sum = jnp.float32(0.0)

    if rows > 0:
        n_main = rows * LANES
        if rem:
            # Ragged: truncated prefix (one contiguous slice; no full pad of
            # both tensors).  Aligned case below is a zero-copy bitcast.
            o2 = flat_o[:n_main].reshape(rows, LANES)
            m2 = flat_m[:n_main].reshape(rows, LANES)
        else:
            o2 = flat_o.reshape(rows, LANES)
            m2 = flat_m.reshape(rows, LANES)

        o_item = jnp.dtype(outputs.dtype).itemsize
        m_item = jnp.dtype(masks.dtype).itemsize

        # Round tile height to the packed sublane granularity of the
        # narrowest input dtype (8 f32 / 16 bf16 / 32 int8,bool).
        pack = max(1, 4 // min(o_item, m_item))
        sub = SUBLANES * pack
        tile_rows = max(sub, (int(tile_rows) // sub) * sub)
        rows_rounded = ((rows + sub - 1) // sub) * sub
        tile_rows = min(tile_rows, rows_rounded)

        num_tiles = -(-rows // tile_rows)

        # v7x: split tiles over a leading "parallel" axis so both TensorCores
        # get a chunk; odd tile counts use cdiv + in-kernel overhang skip
        # instead of silently serializing onto one core.
        if num_parallel_chunks > 1 and num_tiles >= num_parallel_chunks:
            num_chunks = int(num_parallel_chunks)
        else:
            num_chunks = 1
        steps_per_chunk = -(-num_tiles // num_chunks)
        has_overhang = num_chunks * steps_per_chunk != num_tiles
        has_tail = (rows % tile_rows) != 0

        kernel = functools.partial(
            _combo_partials_kernel,
            beta=beta, eps=eps, rows_valid=rows, tile_rows=tile_rows,
            steps_per_chunk=steps_per_chunk, num_tiles=num_tiles,
            has_tail=has_tail, has_overhang=has_overhang,
            binary_masks=binary_masks, reduce_ilp=reduce_ilp)

        if has_overhang:
            def in_map(p, j):
                # Clamp overhang steps to the last valid tile so the DMA
                # stays in-bounds; the kernel skips their accumulation.
                return (jnp.minimum(p * steps_per_chunk + j, num_tiles - 1), 0)
        else:
            def in_map(p, j):
                return (p * steps_per_chunk + j, 0)

        spec_kwargs = {}
        if input_buffers != 2:
            spec_kwargs["pipeline_mode"] = pl.Buffered(int(input_buffers))
        in_specs = [pl.BlockSpec((tile_rows, LANES), in_map, **spec_kwargs),
                    pl.BlockSpec((tile_rows, LANES), in_map, **spec_kwargs)]

        out_bytes = num_chunks * 3 * SUBLANES * LANES * 4
        in_bytes = input_buffers * tile_rows * LANES * (o_item + m_item)
        vmem_limit = int(min(max(2 * in_bytes + 2 * out_bytes, 32 << 20),
                             48 << 20))
        cost = pl.CostEstimate(
            flops=10 * n_main,
            transcendentals=(1 if binary_masks else 2) * n_main,
            bytes_accessed=int(o2.nbytes) + int(m2.nbytes) + out_bytes)

        partials = pl.pallas_call(
            kernel,
            out_shape=jax.ShapeDtypeStruct(
                (num_chunks, 3, SUBLANES, LANES), jnp.float32),
            grid_spec=pltpu.PrefetchScalarGridSpec(
                num_scalar_prefetch=0,
                grid=(num_chunks, steps_per_chunk),
                in_specs=in_specs,
                out_specs=pl.BlockSpec((1, 3, SUBLANES, LANES),
                                       lambda p, j: (p, 0, 0, 0)),
            ),
            compiler_params=pltpu.CompilerParams(
                dimension_semantics=("parallel", "arbitrary"),
                vmem_limit_bytes=vmem_limit),
            cost_estimate=cost,
        )(o2, m2)

        # Tiny final combine in JAX: cross-lane reduce of 3*num_chunks vregs.
        sums = jnp.sum(partials, axis=(0, 2, 3))
        intersection = sums[0]
        union = sums[1]
        pre_sum = sums[2]

    if rem:
        # <128 leftover elements: negligible, do them in plain jnp.
        o_t = flat_o[rows * LANES:].astype(jnp.float32)
        m_t = flat_m[rows * LANES:].astype(jnp.float32)
        intersection = intersection + jnp.sum(o_t * m_t)
        union = union + jnp.sum(o_t) + jnp.sum(m_t)
        oc = jnp.clip(o_t, eps, 1.0 - eps)
        pre_sum = pre_sum + jnp.sum(
            beta * (m_t * jnp.log(oc))
            + (1.0 - beta) * ((1.0 - m_t) * jnp.log(1.0 - oc)))

    dsc = jnp.where(union > 0.0, 2.0 * intersection / union, 1.0)
    mce = -pre_sum / n_valid
    return alpha * mce + (1.0 - alpha) * (1.0 - dsc)


def ref_combo_loss(outputs, masks, alpha, beta):
    outputs = outputs.astype(jnp.float32)
    masks = masks.astype(jnp.float32)
    intersection = jnp.sum(outputs * masks)
    union = jnp.sum(outputs) + jnp.sum(masks)
    dsc = jnp.where(union > 0.0, 2.0 * intersection / union, 1.0)
    eps = 1e-4
    oc = jnp.clip(outputs, eps, 1.0 - eps)
    pre = beta * (masks * jnp.log(oc)) + (1.0 - beta) * (
        (1.0 - masks) * jnp.log(1.0 - oc))
    mce = -jnp.mean(pre)
    return alpha * mce + (1.0 - alpha) * (1.0 - dsc)


if __name__ == "__main__":
    # ComboLoss "parameters" (scalars from __init__), set deterministically.
    alpha, beta = 0.7, 0.4

    key = jax.random.PRNGKey(0)
    k1, k2, k3, k4 = jax.random.split(key, 4)

    # Primary small test: NCHW probabilities + binary masks (lane aligned).
    shape = (2, 4, 16, 16)
    outputs = jax.random.uniform(k1, shape, dtype=jnp.float32)
    masks = (jax.random.uniform(k2, shape) > 0.5).astype(jnp.float32)

    ref = ref_combo_loss(outputs, masks, alpha, beta)

    # Binary-mask fast path (single log per element).
    loss = jax.block_until_ready(
        combo_loss(outputs, masks, alpha, beta, binary_masks=True))
    assert jnp.allclose(loss, ref, rtol=1e-5, atol=1e-5), (loss, ref)

    # General (soft-mask) path with tiny tiles: multi-tile grid + even
    # 2-chunk parallel split.
    loss2 = jax.block_until_ready(
        combo_loss(outputs, masks, alpha, beta, tile_rows=8))
    assert jnp.allclose(loss2, ref, rtol=1e-5, atol=1e-5), (loss2, ref)

    # Odd tile count: exercises the cdiv chunk split + overhang-tile skip.
    shape4 = (3, 4, 16, 16)
    o4 = jax.random.uniform(k3, shape4, dtype=jnp.float32)
    m4 = (jax.random.uniform(k4, shape4) > 0.5).astype(jnp.float32)
    loss4 = jax.block_until_ready(combo_loss(o4, m4, alpha, beta, tile_rows=8))
    ref4 = ref_combo_loss(o4, m4, alpha, beta)
    assert jnp.allclose(loss4, ref4, rtol=1e-5, atol=1e-5), (loss4, ref4)

    # Ragged size: truncated kernel view + last-tile row masking + <128
    # remainder folded in with plain jnp (no full-tensor pad copy).
    shape3 = (2, 3, 20, 20)
    o3 = jax.random.uniform(k3, shape3, dtype=jnp.float32)
    m3 = (jax.random.uniform(k4, shape3) > 0.5).astype(jnp.float32)
    loss3 = jax.block_until_ready(combo_loss(o3, m3, alpha, beta))
    ref3 = ref_combo_loss(o3, m3, alpha, beta)
    assert jnp.allclose(loss3, ref3, rtol=1e-5, atol=1e-5), (loss3, ref3)

    print("KERNEL_OK")
</pallas_src>

<mosaic_0001>
module attributes {stable_mosaic.version = 11 : i64} {
  func.func @_combo_partials_kernel(%arg0: i32, %arg1: i32, %arg2: memref<16x128xf32, #tpu.memory_space<vmem>>, %arg3: memref<16x128xf32, #tpu.memory_space<vmem>>, %arg4: memref<1x3x8x128xf32, #tpu.memory_space<vmem>>) attributes {dimension_semantics = [#tpu.dimension_semantics<parallel>, #tpu.dimension_semantics<arbitrary>], iteration_bounds = array<i64: 1, 1>, scalar_prefetch = 0 : i64, scratch_operands = 0 : i64, tpu.core_type = #tpu.core_type<tc>, window_params = [{transform_indices = @transform_0, window_bounds = array<i64: 16, 128>}, {transform_indices = @transform_1, window_bounds = array<i64: 16, 128>}, {transform_indices = @transform_2, window_bounds = array<i64: 1, 3, 8, 128>}]} {
    %c0_i32 = arith.constant 0 : i32
    %0 = arith.cmpi eq, %arg1, %c0_i32 : i32
    %1 = arith.extui %0 : i1 to i32
    %c0_i32_0 = arith.constant 0 : i32
    %2 = arith.cmpi ne, %1, %c0_i32_0 : i32
    scf.if %2 {
      %cst_37 = arith.constant 0.000000e+00 : f32
      %51 = vector.broadcast %cst_37 : f32 to vector<1x3x8x128xf32>
      %c0_38 = arith.constant 0 : index
      %c0_39 = arith.constant 0 : index
      %c0_40 = arith.constant 0 : index
      %c0_41 = arith.constant 0 : index
      %52 = vector.load %arg4[%c0_38, %c0_39, %c0_40, %c0_41] : memref<1x3x8x128xf32, #tpu.memory_space<vmem>>, vector<1x3x8x128xf32>
      tpu.vector_store %arg4[%c0_38, %c0_39, %c0_40, %c0_41], %51 {strides = array<i32>} : memref<1x3x8x128xf32, #tpu.memory_space<vmem>>, vector<1x3x8x128xf32>,
    } else {
    }
    %c0 = arith.constant 0 : index
    %c0_1 = arith.constant 0 : index
    %3 = vector.load %arg2[%c0, %c0_1] : memref<16x128xf32, #tpu.memory_space<vmem>>, vector<16x128xf32>
    %c0_2 = arith.constant 0 : index
    %c0_3 = arith.constant 0 : index
    %4 = vector.load %arg3[%c0_2, %c0_3] : memref<16x128xf32, #tpu.memory_space<vmem>>, vector<16x128xf32>
    %5 = arith.mulf %3, %4 : vector<16x128xf32>
    %6 = arith.addf %3, %4 : vector<16x128xf32>
    %cst = arith.constant 9.99999974E-5 : f32
    %cst_4 = arith.constant 0.999899983 : f32
    %7 = vector.broadcast %cst : f32 to vector<16x128xf32>
    %8 = arith.maximumf %7, %3 : vector<16x128xf32>
    %9 = vector.broadcast %cst_4 : f32 to vector<16x128xf32>
    %10 = arith.minimumf %9, %8 : vector<16x128xf32>
    %cst_5 = arith.constant 5.000000e-01 : f32
    %11 = vector.broadcast %cst_5 : f32 to vector<16x128xf32>
    %12 = arith.cmpf ogt, %4, %11 : vector<16x128xf32>
    %cst_6 = arith.constant 4.000000e-01 : f32
    %cst_7 = arith.constant 6.000000e-01 : f32
    %13 = vector.broadcast %cst_6 : f32 to vector<16x128xf32>
    %14 = vector.broadcast %cst_7 : f32 to vector<16x128xf32>
    %15 = arith.select %12, %13, %14 : vector<16x128xi1>, vector<16x128xf32>
    %cst_8 = arith.constant 1.000000e+00 : f32
    %16 = vector.broadcast %cst_8 : f32 to vector<16x128xf32>
    %17 = arith.subf %16, %10 : vector<16x128xf32>
    %18 = arith.select %12, %10, %17 : vector<16x128xi1>, vector<16x128xf32>
    %19 = math.log %18 : vector<16x128xf32>
    %20 = arith.mulf %15, %19 : vector<16x128xf32>
    %c0_9 = arith.constant 0 : index
    %c0_10 = arith.constant 0 : index
    %c0_11 = arith.constant 0 : index
    %c0_12 = arith.constant 0 : index
    %21 = vector.load %arg4[%c0_9, %c0_10, %c0_11, %c0_12] : memref<1x3x8x128xf32, #tpu.memory_space<vmem>>, vector<1x1x8x128xf32>
    %22 = vector.shape_cast %21 : vector<1x1x8x128xf32> to vector<8x128xf32>
    %23 = vector.shape_cast %5 : vector<16x128xf32> to vector<2x8x128xf32>
    %24 = vector.shape_cast %23 : vector<2x8x128xf32> to vector<2x1x8x128xf32>
    %cst_13 = arith.constant dense<0.000000e+00> : vector<2x8x128xf32>
    %25 = vector.multi_reduction <add>, %24, %cst_13 [1] : vector<2x1x8x128xf32> to vector<2x8x128xf32>
    %cst_14 = arith.constant dense<0.000000e+00> : vector<8x128xf32>
    %26 = vector.multi_reduction <add>, %25, %cst_14 [0] : vector<2x8x128xf32> to vector<8x128xf32>
    %27 = arith.addf %22, %26 : vector<8x128xf32>
    %c0_15 = arith.constant 0 : index
    %c0_16 = arith.constant 0 : index
    %c0_17 = arith.constant 0 : index
    %c0_18 = arith.constant 0 : index
    %28 = vector.load %arg4[%c0_15, %c0_16, %c0_17, %c0_18] : memref<1x3x8x128xf32, #tpu.memory_space<vmem>>, vector<1x1x8x128xf32>
    %29 = vector.shape_cast %28 : vector<1x1x8x128xf32> to vector<8x128xf32>
    %30 = vector.shape_cast %27 : vector<8x128xf32> to vector<1x1x8x128xf32>
    tpu.vector_store %arg4[%c0_15, %c0_16, %c0_17, %c0_18], %30 {strides = array<i32>} : memref<1x3x8x128xf32, #tpu.memory_space<vmem>>, vector<1x1x8x128xf32>,
    %c0_19 = arith.constant 0 : index
    %c1 = arith.constant 1 : index
    %c0_20 = arith.constant 0 : index
    %c0_21 = arith.constant 0 : index
    %31 = vector.load %arg4[%c0_19, %c1, %c0_20, %c0_21] : memref<1x3x8x128xf32, #tpu.memory_space<vmem>>, vector<1x1x8x128xf32>
    %32 = vector.shape_cast %31 : vector<1x1x8x128xf32> to vector<8x128xf32>
    %33 = vector.shape_cast %6 : vector<16x128xf32> to vector<2x8x128xf32>
    %34 = vector.shape_cast %33 : vector<2x8x128xf32> to vector<2x1x8x128xf32>
    %cst_22 = arith.constant dense<0.000000e+00> : vector<2x8x128xf32>
    %35 = vector.multi_reduction <add>, %34, %cst_22 [1] : vector<2x1x8x128xf32> to vector<2x8x128xf32>
    %cst_23 = arith.constant dense<0.000000e+00> : vector<8x128xf32>
    %36 = vector.multi_reduction <add>, %35, %cst_23 [0] : vector<2x8x128xf32> to vector<8x128xf32>
    %37 = arith.addf %32, %36 : vector<8x128xf32>
    %c0_24 = arith.constant 0 : index
    %c1_25 = arith.constant 1 : index
    %c0_26 = arith.constant 0 : index
    %c0_27 = arith.constant 0 : index
    %38 = vector.load %arg4[%c0_24, %c1_25, %c0_26, %c0_27] : memref<1x3x8x128xf32, #tpu.memory_space<vmem>>, vector<1x1x8x128xf32>
    %39 = vector.shape_cast %38 : vector<1x1x8x128xf32> to vector<8x128xf32>
    %40 = vector.shape_cast %37 : vector<8x128xf32> to vector<1x1x8x128xf32>
    tpu.vector_store %arg4[%c0_24, %c1_25, %c0_26, %c0_27], %40 {strides = array<i32>} : memref<1x3x8x128xf32, #tpu.memory_space<vmem>>, vector<1x1x8x128xf32>,
    %c0_28 = arith.constant 0 : index
    %c2 = arith.constant 2 : index
    %c0_29 = arith.constant 0 : index
    %c0_30 = arith.constant 0 : index
    %41 = vector.load %arg4[%c0_28, %c2, %c0_29, %c0_30] : memref<1x3x8x128xf32, #tpu.memory_space<vmem>>, vector<1x1x8x128xf32>
    %42 = vector.shape_cast %41 : vector<1x1x8x128xf32> to vector<8x128xf32>
    %43 = vector.shape_cast %20 : vector<16x128xf32> to vector<2x8x128xf32>
    %44 = vector.shape_cast %43 : vector<2x8x128xf32> to vector<2x1x8x128xf32>
    %cst_31 = arith.constant dense<0.000000e+00> : vector<2x8x128xf32>
    %45 = vector.multi_reduction <add>, %44, %cst_31 [1] : vector<2x1x8x128xf32> to vector<2x8x128xf32>
    %cst_32 = arith.constant dense<0.000000e+00> : vector<8x128xf32>
    %46 = vector.multi_reduction <add>, %45, %cst_32 [0] : vector<2x8x128xf32> to vector<8x128xf32>
    %47 = arith.addf %42, %46 : vector<8x128xf32>
    %c0_33 = arith.constant 0 : index
    %c2_34 = arith.constant 2 : index
    %c0_35 = arith.constant 0 : index
    %c0_36 = arith.constant 0 : index
    %48 = vector.load %arg4[%c0_33, %c2_34, %c0_35, %c0_36] : memref<1x3x8x128xf32, #tpu.memory_space<vmem>>, vector<1x1x8x128xf32>
    %49 = vector.shape_cast %48 : vector<1x1x8x128xf32> to vector<8x128xf32>
    %50 = vector.shape_cast %47 : vector<8x128xf32> to vector<1x1x8x128xf32>
    tpu.vector_store %arg4[%c0_33, %c2_34, %c0_35, %c0_36], %50 {strides = array<i32>} : memref<1x3x8x128xf32, #tpu.memory_space<vmem>>, vector<1x1x8x128xf32>,
    return
  }
  func.func @transform_0(%arg0: i32, %arg1: i32) -> (i32, i32) {
    %c1_i32 = arith.constant 1 : i32
    %0 = arith.muli %arg0, %c1_i32 : i32
    %1 = arith.addi %0, %arg1 : i32
    %c0_i32 = arith.constant 0 : i32
    %c0_i32_0 = arith.constant 0 : i32
    return %1, %c0_i32 : i32, i32
  }
  func.func @transform_1(%arg0: i32, %arg1: i32) -> (i32, i32) {
    %c1_i32 = arith.constant 1 : i32
    %0 = arith.muli %arg0, %c1_i32 : i32
    %1 = arith.addi %0, %arg1 : i32
    %c0_i32 = arith.constant 0 : i32
    %c0_i32_0 = arith.constant 0 : i32
    return %1, %c0_i32 : i32, i32
  }
  func.func @transform_2(%arg0: i32, %arg1: i32) -> (i32, i32, i32, i32) {
    %c0_i32 = arith.constant 0 : i32
    %c0_i32_0 = arith.constant 0 : i32
    %c0_i32_1 = arith.constant 0 : i32
    %c0_i32_2 = arith.constant 0 : i32
    return %arg0, %c0_i32, %c0_i32_0, %c0_i32_1 : i32, i32, i32, i32
  }
}

</mosaic_0001>

<llo_original>
// kernel: tpu_custom_call.1
$region0: #{tpu_custom_call.1}
  #allocation0 [shape = 'u32[]', space=smem, size = 0x4, offset = 0x4, fixed_abs, tag = 'smem constant byte address 0x4 - core index']
  #allocation1 [shape = 'u32[72,128]{1,0:T(1,128)}', space=vmem, size = 0x9000, scoped, tag = 'internal scratch']
  %s0 = inlined_call_operand.hbm [shape: f32[16,128], index: 0, kind: input, shape index: {}]
  %s1 = inlined_call_operand.hbm [shape: f32[16,128], index: 1, kind: input, shape index: {}]
  %s2 = inlined_call_operand.hbm [shape: f32[1,3,8,128], index: 2, kind: output, shape index: {}]
  %s3 = sld [smem:[#allocation0]]
  $region30: #{tpu_custom_call.1} parent=0
    _
  %s5 = ssub.s32 1, %s3
  %s6 = scalar_select 0, %s5, %s3
  $region1: #{tpu_custom_call.1} parent=0
    #allocation2 [shape = 'u8[8192]{0}', space=vmem, size = 0x2000, scoped, tag = 'input window, operand 0, single buffered']
    #allocation3 [shape = 's32[1]{0}', space=sflag, size = 0x4, scoped, tag = 'scoped memory for tpu_custom_call.1']
    #allocation4 [shape = 's32[1]{0}', space=sflag, size = 0x4, scoped, tag = 'scoped memory for tpu_custom_call.1']
    #allocation5 [shape = 'u8[8192]{0}', space=vmem, size = 0x2000, scoped, tag = 'input window, operand 1, single buffered']
    #allocation6 [shape = 's32[1]{0}', space=sflag, size = 0x4, scoped, tag = 'scoped memory for tpu_custom_call.1']
    #allocation7 [shape = 'u8[12288]{0}', space=vmem, size = 0x3000, scoped, tag = 'output window, operand 0, single buffered']
    %7 = vsyncpa [#allocation3], 0
    %8 = vsyncpa [#allocation6], 0
    %9 = vsyncpa [#allocation4], 0
    // Predicated region
    $region2: #{tpu_custom_call.1} parent=1 // pred_check
      _
    $region3: #{tpu_custom_call.1} parent=1 // pred_check_branch
      %11 = sbr.rel (0) target = $region5
    $region4: #{tpu_custom_call.1} parent=1 // pred_region
      %s12 = sadd.s32 0, 0
      %s13 = smul.u32 2, %s12
      %15 = vsyncadd [#allocation3], 0
      %s16 = smul.addr %s13, 8
      %s17 = scalar_lea.hbm %s0, %s16
      %s18 = sshll.u32 %s17, 4
      %s19 = int_to_ptr.hbm [resolvable:$true] %s18
      %s20 = sshll.u32 [#allocation2], 4
      %s21 = int_to_ptr.vmem [resolvable:$true] %s20
      %26 = dma.hbm_to_vmem [thread:$0]  %s19, 256, %s21, [#allocation3], 128, 128, 8
    $region5: #{tpu_custom_call.1} parent=1 // pred_fallthru
      _
    // Predicated region
    $region6: #{tpu_custom_call.1} parent=1 // pred_check
      _
    $region7: #{tpu_custom_call.1} parent=1 // pred_check_branch
      %28 = sbr.rel (0) target = $region9
    $region8: #{tpu_custom_call.1} parent=1 // pred_region
      %s29 = sadd.s32 0, 0
      %s30 = smul.u32 2, %s29
      %32 = vsyncadd [#allocation6], 0
      %s33 = smul.addr %s30, 8
      %s34 = scalar_lea.hbm %s1, %s33
      %s35 = sshll.u32 %s34, 4
      %s36 = int_to_ptr.hbm [resolvable:$true] %s35
      %s37 = sshll.u32 [#allocation5], 4
      %s38 = int_to_ptr.vmem [resolvable:$true] %s37
      %43 = dma.hbm_to_vmem [thread:$0]  %s36, 256, %s38, [#allocation6], 128, 128, 8
    $region9: #{tpu_custom_call.1} parent=1 // pred_fallthru
      _
    // Predicated region
    $region10: #{tpu_custom_call.1} parent=1 // pred_check
      _
    $region11: #{tpu_custom_call.1} parent=1 // pred_check_branch
      %45 = sbr.rel (0) target = $region13
    $region12: #{tpu_custom_call.1} parent=1 // pred_region
      %47 = dma.done [#allocation3], 256
    $region13: #{tpu_custom_call.1} parent=1 // pred_fallthru
      _
    // Predicated region
    $region14: #{tpu_custom_call.1} parent=1 // pred_check
      _
    $region15: #{tpu_custom_call.1} parent=1 // pred_check_branch
      %49 = sbr.rel (0) target = $region17
    $region16: #{tpu_custom_call.1} parent=1 // pred_region
      %51 = dma.done [#allocation6], 256
    $region17: #{tpu_custom_call.1} parent=1 // pred_fallthru
      _
    %s52 = sadd.s32 0, 0
    %s53 = smul.u32 2, %s52
    %s54 = sadd.s32 0, 0
    %s55 = smul.u32 2, %s54
    %p56 = scmp.eq.s32.totalorder 0, 0
    // Predicated region
    $region18: #{tpu_custom_call.1} parent=1 // pred_check
      %p57 = pneg %p56
    $region19: #{tpu_custom_call.1} parent=1 // pred_check_branch
      %59 = sbr.rel (%p57) target = $region21
    $region20: #{tpu_custom_call.1} parent=1 // pred_region
      %60 = vst [vmem:[#allocation7] sm:$0xff] 0.0
      %61 = vst [vmem:[#allocation7 + $0x8] sm:$0xff] 0.0
      %62 = vst [vmem:[#allocation7 + $0x10] sm:$0xff] 0.0
    $region21: #{tpu_custom_call.1} parent=1 // pred_fallthru
      _
    %v63 = vld [vmem:[#allocation2] sm:$0xff]
    %v64 = vld [vmem:[#allocation2 + $0x8] sm:$0xff]
    %v65 = vld [vmem:[#allocation5] sm:$0xff]
    %v66 = vld [vmem:[#allocation5 + $0x8] sm:$0xff]
    %v67 = vmul.f32 %v63, %v65
    %v68 = vmul.f32 %v64, %v66
    %v69 = vadd.f32 %v63, %v65
    %v70 = vadd.f32 %v64, %v66
    %v71 = vmax.f32 %v63, 0.0001
    %v72 = vmax.f32 %v64, 0.0001
    %v73 = vmin.f32 %v71, 0.9999
    %v74 = vmin.f32 %v72, 0.9999
    %vm75 = vcmp.gt.f32.partialorder %v65, 0.5
    %vm76 = vcmp.gt.f32.partialorder %v66, 0.5
    %v77 = vsel %vm75, 0.4, 0.6
    %v78 = vsel %vm76, 0.4, 0.6
    %v79 = vsub.f32 1.0, %v73
    %v80 = vsub.f32 1.0, %v74
    %v81 = vsel %vm75, %v73, %v79
    %v82 = vsel %vm76, %v74, %v80
    %v83 = vlog2.pop %v81
    %v84 = vmul.f32 %v83, 0.6931472
    %v85 = vlog2.pop %v82
    %v86 = vmul.f32 %v85, 0.6931472
    %v87 = vmul.f32 %v77, %v84
    %v88 = vmul.f32 %v78, %v86
    %v89 = vld [vmem:[#allocation7] sm:$0xff]
    %v90 = vadd.f32 %v67, 0.0
    %v91 = vadd.f32 %v68, 0.0
    %v92 = vadd.f32 %v90, %v91
    %v93 = vadd.f32 %v89, %v92
    %94 = vst [vmem:[#allocation7] sm:$0xff] %v93
    %s95 = scalar_lea.vmem [#allocation7], 8
    %v96 = vld [vmem:[%s95] sm:$0xff]
    %v97 = vadd.f32 %v69, 0.0
    %v98 = vadd.f32 %v70, 0.0
    %v99 = vadd.f32 %v97, %v98
    %v100 = vadd.f32 %v96, %v99
    %101 = vst [vmem:[%s95] sm:$0xff] %v100
    %s102 = scalar_lea.vmem [#allocation7], 16
    %v103 = vld [vmem:[%s102] sm:$0xff]
    %v104 = vadd.f32 %v87, 0.0
    %v105 = vadd.f32 %v88, 0.0
    %v106 = vadd.f32 %v104, %v105
    %v107 = vadd.f32 %v103, %v106
    %108 = vst [vmem:[%s102] sm:$0xff] %v107
    // Predicated region
    $region22: #{tpu_custom_call.1} parent=1 // pred_check
      _
    $region23: #{tpu_custom_call.1} parent=1 // pred_check_branch
      %110 = sbr.rel (0) target = $region25
    $region24: #{tpu_custom_call.1} parent=1 // pred_region
      %112 = vsyncadd [#allocation4], 0
      %s113 = sshll.u32 [#allocation7], 4
      %s114 = int_to_ptr.vmem [resolvable:$true] %s113
      %s115 = sshll.u32 %s2, 4
      %s116 = int_to_ptr.hbm [resolvable:$true] %s115
      %121 = dma.vmem_to_hbm [thread:$0]  %s114, 384, %s116, [#allocation4], 128, 128, 8
    $region25: #{tpu_custom_call.1} parent=1 // pred_fallthru
      _
    // Predicated region
    $region26: #{tpu_custom_call.1} parent=1 // pred_check
      _
    $region27: #{tpu_custom_call.1} parent=1 // pred_check_branch
      %123 = sbr.rel (0) target = $region29
    $region28: #{tpu_custom_call.1} parent=1 // pred_region
      %125 = dma.done [#allocation4], 384
    $region29: #{tpu_custom_call.1} parent=1 // pred_fallthru
      _
    %126 = vsyncpa [#allocation3], 1
    %127 = vsyncpa [#allocation6], 1
    %128 = vsyncpa [#allocation4], 1

</llo_original>
